<compile_context>
chip_gen: v5e
topology: v5e:2x2
jax: 0.10.0
libtpu: 0.0.40
codegen_flags: <defaults>
</compile_context>

<pallas_src>
import functools

import jax
import jax.numpy as jnp
from jax import lax
from jax.experimental import pallas as pl
from jax.experimental.pallas import tpu as pltpu

TAU = 0.07
ALPHA = 10.0
EPS_NORM = 1e-12      # F.normalize eps
NEG_BIG = -1e30       # masks padded cluster columns out of the softmax
DENS_MIN = 1e-6


# ---------------------------------------------------------------- helpers ----
def _round_up(x, m):
    return ((x + m - 1) // m) * m


def _normalize_rows(x):
    # x / max(||x||, eps) == x * rsqrt(max(||x||^2, eps^2))  (EUP rsqrt + VPU mul)
    ss = jnp.sum(x * x, axis=1, keepdims=True)
    return x * lax.rsqrt(jnp.maximum(ss, EPS_NORM * EPS_NORM))


def _log_softmax_rows(x):
    m = jnp.max(x, axis=1, keepdims=True)
    s = x - m
    return s - jnp.log(jnp.sum(jnp.exp(s), axis=1, keepdims=True))


def _col_to_row(col):
    # (B, 1) -> (1, B) lane-dense row via select + sublane reduce (no vector transpose).
    b = col.shape[0]
    ri = lax.broadcasted_iota(jnp.int32, (b, b), 0)
    ci = lax.broadcasted_iota(jnp.int32, (b, b), 1)
    return jnp.sum(jnp.where(ri == ci, col, 0.0), axis=0, keepdims=True)


# ------------------------------------------------------------ fused kernel ---
def _pcl_kernel(counts_ref, feat_ref, labels_ref, out_ref, *,
                tau, alpha, c_max, num_hier):
    f = _normalize_rows(feat_ref[...].astype(jnp.float32))             # (B, D)
    b = f.shape[0]
    labels = labels_ref[...]                                           # (B, M) int32

    iota_bc = lax.broadcasted_iota(jnp.int32, (b, c_max), 1)           # (B, C)
    iota_1c = lax.broadcasted_iota(jnp.int32, (1, c_max), 1)           # (1, C)

    inv_tau = 1.0 / tau
    inv_m = 1.0 / num_hier
    total = jnp.zeros((b, 1), jnp.float32)

    for m in range(num_hier):                     # M is small & static -> unrolled
        lab = labels[:, m:m + 1]                                       # (B, 1)
        onehot = (lab == iota_bc).astype(jnp.float32)                  # (B, C)
        c_count = counts_ref[m]        # labels.max()+1 for hierarchy m (SMEM scalar)

        if m == 0:
            # ------------- instance-wise contrastive term (hierarchy 0) -------
            sim = lax.dot_general(f, f, (((1,), (1,)), ((), ())),
                                  preferred_element_type=jnp.float32) * inv_tau
            # label-equality mask == onehot @ onehot^T (rows are one-hot -> exact 0/1).
            pos_mask = lax.dot_general(onehot, onehot, (((1,), (1,)), ((), ())),
                                       preferred_element_type=jnp.float32)
            logp = _log_softmax_rows(sim)
            n_po = jnp.sum(pos_mask, axis=1, keepdims=True)            # (B, 1)
            pos_sum = jnp.sum(logp * pos_mask, axis=1, keepdims=True)  # (B, 1)
            total = total + jnp.where(
                n_po > 0,
                -pos_sum * pl.reciprocal(jnp.maximum(n_po, 1.0), approx=True),
                0.0)

        # ---------------- instance-prototype term for hierarchy m -------------
        z = jnp.sum(onehot, axis=0, keepdims=True)                     # (1, C) sizes
        safe_z = jnp.maximum(z, 1.0)
        r_z = 1.0 / safe_z            # exact: keeps singleton prototypes exact
        # prototypes as (D, C); 1/|cluster| folded into one-hot before the matmul.
        proto = lax.dot_general(f, onehot * r_z, (((0,), (0,)), ((), ())),
                                preferred_element_type=jnp.float32)    # (D, C)

        # member -> own-prototype distances (difference form, like torch.norm).
        own_proto = lax.dot_general(onehot, proto, (((1,), (1,)), ((), ())),
                                    preferred_element_type=jnp.float32)  # (B, D)
        diff = f - own_proto
        dist_own = jnp.sqrt(jnp.sum(diff * diff, axis=1, keepdims=True))  # (B, 1)
        sum_dist = jnp.sum(onehot * dist_own, axis=0, keepdims=True)      # (1, C)
        dens = (sum_dist * r_z) / (safe_z * jnp.log(safe_z + alpha))
        dens = jnp.maximum(jnp.where(z > 0, dens, 0.0), DENS_MIN)         # (1, C)

        # normalized prototypes and scaled similarities (MXU-natural (B,D)x(D,C)).
        psq = jnp.sum(proto * proto, axis=0, keepdims=True)               # (1, C)
        proto_n = proto * lax.rsqrt(jnp.maximum(psq, EPS_NORM * EPS_NORM))
        sims = lax.dot_general(f, proto_n, (((1,), (0,)), ((), ())),
                               preferred_element_type=jnp.float32)        # (B, C)
        scaled = sims * pl.reciprocal(dens, approx=True)
        # mask padded clusters (ids >= labels.max()+1) out of the softmax denominator.
        scaled = jnp.where(iota_1c < c_count, scaled, NEG_BIG)
        logp_m = _log_softmax_rows(scaled)
        pos_logp = jnp.sum(logp_m * onehot, axis=1, keepdims=True)        # (B, 1)
        total = total - pos_logp * inv_m

    out_ref[...] = _col_to_row(total)                                     # (1, B)


# ------------------------------------------------------------------ wrapper --
def pcl_loss(features, hierarchical_labels, *, tau=TAU, alpha=ALPHA, c_max=None):
    """Per-instance PCL loss (instance-wise + instance-prototype), shape (B,)."""
    B, D = features.shape
    M = hierarchical_labels.shape[1]
    if c_max is None:
        # Cluster ids come from clustering the batch, so labels < B; pad lane-friendly.
        c_max = _round_up(max(B, 8), 128)
    labels = hierarchical_labels.astype(jnp.int32)                     # (B, M)
    counts = jnp.max(labels, axis=0) + 1                               # (M,) on-device

    grid_spec = pltpu.PrefetchScalarGridSpec(
        num_scalar_prefetch=1,
        grid=(1,),
        in_specs=[
            pl.BlockSpec((B, D), lambda i, counts: (0, 0)),
            pl.BlockSpec((B, M), lambda i, counts: (0, 0)),
        ],
        out_specs=pl.BlockSpec((1, B), lambda i, counts: (0, 0)),
    )
    out = pl.pallas_call(
        functools.partial(_pcl_kernel, tau=tau, alpha=alpha,
                          c_max=c_max, num_hier=M),
        grid_spec=grid_spec,
        out_shape=jax.ShapeDtypeStruct((1, B), jnp.float32),
        compiler_params=pltpu.CompilerParams(
            dimension_semantics=("arbitrary",)),
    )(counts, features, labels)
    return out[0]


# ------------------------------------------------------- pure-JAX reference --
def _ref_pcl(features, hlabels):
    f = features.astype(jnp.float32)
    f = f / jnp.maximum(jnp.linalg.norm(f, axis=1, keepdims=True), EPS_NORM)
    B = f.shape[0]
    # instance-wise
    l0 = hlabels[:, 0]
    sim = (f @ f.T) / TAU
    mask = (l0[:, None] == l0[None, :]).astype(jnp.float32)
    logp = jax.nn.log_softmax(sim, axis=1)
    npo = mask.sum(axis=1)
    ins = jnp.where(npo > 0, -(logp * mask).sum(axis=1) / jnp.maximum(npo, 1.0), 0.0)
    # instance-prototype
    M = hlabels.shape[1]
    proto_loss = jnp.zeros((B,), jnp.float32)
    for m in range(M):
        labels = hlabels[:, m]
        C = int(jax.device_get(jnp.max(labels))) + 1
        oh = jax.nn.one_hot(labels, C, dtype=jnp.float32)
        sizes = oh.sum(axis=0)
        safe = jnp.maximum(sizes, 1.0)
        protos = (oh.T @ f) / safe[:, None]
        dist = jnp.linalg.norm(f[:, None, :] - protos[None, :, :], axis=-1)
        dens = jnp.where(sizes > 0,
                         ((oh * dist).sum(axis=0) / safe) / (safe * jnp.log(safe + ALPHA)),
                         0.0)
        dens = jnp.maximum(dens, DENS_MIN)
        pn = protos / jnp.maximum(jnp.linalg.norm(protos, axis=1, keepdims=True), EPS_NORM)
        lp = jax.nn.log_softmax((f @ pn.T) / dens[None, :], axis=1)
        proto_loss = proto_loss - lp[jnp.arange(B), labels]
    return ins + proto_loss / M


# --------------------------------------------------------------------- main --
if __name__ == "__main__":
    key = jax.random.PRNGKey(0)
    k_feat, k_l0, k_l1 = jax.random.split(key, 3)

    B, D, M = 16, 32, 2
    features = jax.random.normal(k_feat, (B, D), dtype=jnp.float32)
    labels0 = jax.random.randint(k_l0, (B,), 0, 4, dtype=jnp.int32)   # hierarchy 0
    labels1 = jax.random.randint(k_l1, (B,), 0, 3, dtype=jnp.int32)   # hierarchy 1
    hierarchical_labels = jnp.stack([labels0, labels1], axis=1)       # (B, M)

    total = jax.jit(pcl_loss)(features, hierarchical_labels)
    total = jax.block_until_ready(total)

    ref = jax.block_until_ready(_ref_pcl(features, hierarchical_labels))
    assert total.shape == (B,)
    assert jnp.allclose(total, ref, rtol=2e-2, atol=2e-2), (total, ref)

    print("KERNEL_OK")
</pallas_src>

<mosaic_0001>
module attributes {stable_mosaic.version = 11 : i64} {
  func.func @_pcl_kernel(%arg0: i32, %arg1: memref<2xi32, #tpu.memory_space<smem>>, %arg2: memref<16x32xf32, #tpu.memory_space<vmem>>, %arg3: memref<16x2xi32, #tpu.memory_space<vmem>>, %arg4: memref<1x16xf32, #tpu.memory_space<vmem>>) attributes {dimension_semantics = [#tpu.dimension_semantics<arbitrary>], iteration_bounds = array<i64: 1>, scalar_prefetch = 1 : i64, scratch_operands = 0 : i64, tpu.core_type = #tpu.core_type<tc>, window_params = [{pipeline_mode = #tpu.pipeline_mode<synchronous>, transform_indices = @transform_0, window_bounds = array<i64: 16, 32>}, {pipeline_mode = #tpu.pipeline_mode<synchronous>, transform_indices = @transform_1, window_bounds = array<i64: 16, 2>}, {pipeline_mode = #tpu.pipeline_mode<synchronous>, transform_indices = @transform_2, window_bounds = array<i64: 1, 16>}]} {
    %c0 = arith.constant 0 : index
    %c0_0 = arith.constant 0 : index
    %0 = vector.load %arg2[%c0, %c0_0] : memref<16x32xf32, #tpu.memory_space<vmem>>, vector<16x32xf32>
    %1 = arith.mulf %0, %0 : vector<16x32xf32>
    %cst = arith.constant dense<0.000000e+00> : vector<16xf32>
    %2 = vector.multi_reduction <add>, %1, %cst [1] : vector<16x32xf32> to vector<16xf32>
    %3 = vector.shape_cast %2 : vector<16xf32> to vector<16x1xf32>
    %cst_1 = arith.constant 1.000000e-24 : f32
    %4 = vector.broadcast %cst_1 : f32 to vector<16x1xf32>
    %5 = arith.maximumf %3, %4 : vector<16x1xf32>
    %6 = math.rsqrt %5 : vector<16x1xf32>
    %7 = vector.broadcast %6 : vector<16x1xf32> to vector<16x32xf32>
    %8 = arith.mulf %0, %7 : vector<16x32xf32>
    %c0_2 = arith.constant 0 : index
    %c0_3 = arith.constant 0 : index
    %9 = vector.load %arg3[%c0_2, %c0_3] : memref<16x2xi32, #tpu.memory_space<vmem>>, vector<16x2xi32>
    %10 = tpu.iota {dimensions = array<i32: 1>} : vector<16x128xi32>
    %11 = tpu.iota {dimensions = array<i32: 1>} : vector<1x128xi32>
    %cst_4 = arith.constant 0.000000e+00 : f32
    %12 = vector.broadcast %cst_4 : f32 to vector<16x1xf32>
    %13 = vector.extract_strided_slice %9 {offsets = [0, 0], sizes = [16, 1], strides = [1, 1]} : vector<16x2xi32> to vector<16x1xi32>
    %14 = vector.broadcast %13 : vector<16x1xi32> to vector<16x128xi32>
    %15 = arith.cmpi eq, %14, %10 : vector<16x128xi32>
    %16 = arith.extui %15 : vector<16x128xi1> to vector<16x128xi32>
    %17 = arith.sitofp %16 : vector<16x128xi32> to vector<16x128xf32>
    %c0_5 = arith.constant 0 : index
    %18 = memref.load %arg1[%c0_5] : memref<2xi32, #tpu.memory_space<smem>>
    %cst_6 = arith.constant dense<0.000000e+00> : vector<16x16xf32>
    %19 = tpu.matmul %8, %8, %cst_6 {dimension_numbers = #tpu.dot_dimension_numbers<[1], [1], [0], [0], [0, 0, 1, 0], [], []>} : vector<16x32xf32>, vector<16x32xf32>, vector<16x16xf32> -> vector<16x16xf32>
    %cst_7 = arith.constant 14.2857141 : f32
    %20 = vector.broadcast %cst_7 : f32 to vector<16x16xf32>
    %21 = arith.mulf %19, %20 : vector<16x16xf32>
    %cst_8 = arith.constant dense<0.000000e+00> : vector<16x16xf32>
    %22 = tpu.matmul %17, %17, %cst_8 {dimension_numbers = #tpu.dot_dimension_numbers<[1], [1], [0], [0], [0, 0, 1, 0], [], []>} : vector<16x128xf32>, vector<16x128xf32>, vector<16x16xf32> -> vector<16x16xf32>
    %cst_9 = arith.constant dense<0xFF800000> : vector<16xf32>
    %23 = vector.multi_reduction <maximumf>, %21, %cst_9 [1] : vector<16x16xf32> to vector<16xf32>
    %24 = vector.shape_cast %23 : vector<16xf32> to vector<16x1xf32>
    %25 = vector.broadcast %24 : vector<16x1xf32> to vector<16x16xf32>
    %26 = arith.subf %21, %25 : vector<16x16xf32>
    %27 = math.exp %26 : vector<16x16xf32>
    %cst_10 = arith.constant dense<0.000000e+00> : vector<16xf32>
    %28 = vector.multi_reduction <add>, %27, %cst_10 [1] : vector<16x16xf32> to vector<16xf32>
    %29 = vector.shape_cast %28 : vector<16xf32> to vector<16x1xf32>
    %30 = math.log %29 : vector<16x1xf32>
    %31 = vector.broadcast %30 : vector<16x1xf32> to vector<16x16xf32>
    %32 = arith.subf %26, %31 : vector<16x16xf32>
    %cst_11 = arith.constant dense<0.000000e+00> : vector<16xf32>
    %33 = vector.multi_reduction <add>, %22, %cst_11 [1] : vector<16x16xf32> to vector<16xf32>
    %34 = vector.shape_cast %33 : vector<16xf32> to vector<16x1xf32>
    %35 = arith.mulf %32, %22 : vector<16x16xf32>
    %cst_12 = arith.constant dense<0.000000e+00> : vector<16xf32>
    %36 = vector.multi_reduction <add>, %35, %cst_12 [1] : vector<16x16xf32> to vector<16xf32>
    %37 = vector.shape_cast %36 : vector<16xf32> to vector<16x1xf32>
    %cst_13 = arith.constant 0.000000e+00 : f32
    %38 = vector.broadcast %cst_13 : f32 to vector<16x1xf32>
    %39 = arith.cmpf ogt, %34, %38 : vector<16x1xf32>
    %cst_14 = arith.constant 0.000000e+00 : f32
    %40 = vector.broadcast %cst_14 : f32 to vector<16x1xf32>
    %41 = arith.subf %40, %37 : vector<16x1xf32>
    %cst_15 = arith.constant 1.000000e+00 : f32
    %42 = vector.broadcast %cst_15 : f32 to vector<16x1xf32>
    %43 = arith.maximumf %34, %42 : vector<16x1xf32>
    %44 = tpu.reciprocal %43 {approx = true} : vector<16x1xf32> -> vector<16x1xf32>
    %45 = arith.mulf %41, %44 : vector<16x1xf32>
    %cst_16 = arith.constant 0.000000e+00 : f32
    %46 = vector.broadcast %cst_16 : f32 to vector<16x1xf32>
    %47 = arith.select %39, %45, %46 : vector<16x1xi1>, vector<16x1xf32>
    %48 = arith.addf %12, %47 : vector<16x1xf32>
    %cst_17 = arith.constant dense<0.000000e+00> : vector<128xf32>
    %49 = vector.multi_reduction <add>, %17, %cst_17 [0] : vector<16x128xf32> to vector<128xf32>
    %50 = vector.shape_cast %49 : vector<128xf32> to vector<1x128xf32>
    %cst_18 = arith.constant 1.000000e+00 : f32
    %51 = vector.broadcast %cst_18 : f32 to vector<1x128xf32>
    %52 = arith.maximumf %50, %51 : vector<1x128xf32>
    %cst_19 = arith.constant 1.000000e+00 : f32
    %53 = vector.broadcast %cst_19 : f32 to vector<1x128xf32>
    %54 = arith.divf %53, %52 : vector<1x128xf32>
    %55 = vector.broadcast %54 : vector<1x128xf32> to vector<16x128xf32>
    %56 = arith.mulf %17, %55 : vector<16x128xf32>
    %cst_20 = arith.constant dense<0.000000e+00> : vector<32x128xf32>
    %57 = tpu.matmul %8, %56, %cst_20 {dimension_numbers = #tpu.dot_dimension_numbers<[0], [0], [1], [1], [0, 1, 1, 1], [], []>} : vector<16x32xf32>, vector<16x128xf32>, vector<32x128xf32> -> vector<32x128xf32>
    %cst_21 = arith.constant dense<0.000000e+00> : vector<16x32xf32>
    %58 = tpu.matmul %17, %57, %cst_21 {dimension_numbers = #tpu.dot_dimension_numbers<[1], [1], [0], [0], [0, 0, 1, 0], [], []>} : vector<16x128xf32>, vector<32x128xf32>, vector<16x32xf32> -> vector<16x32xf32>
    %59 = arith.subf %8, %58 : vector<16x32xf32>
    %60 = arith.mulf %59, %59 : vector<16x32xf32>
    %cst_22 = arith.constant dense<0.000000e+00> : vector<16xf32>
    %61 = vector.multi_reduction <add>, %60, %cst_22 [1] : vector<16x32xf32> to vector<16xf32>
    %62 = vector.shape_cast %61 : vector<16xf32> to vector<16x1xf32>
    %63 = math.sqrt %62 : vector<16x1xf32>
    %64 = vector.broadcast %63 : vector<16x1xf32> to vector<16x128xf32>
    %65 = arith.mulf %17, %64 : vector<16x128xf32>
    %cst_23 = arith.constant dense<0.000000e+00> : vector<128xf32>
    %66 = vector.multi_reduction <add>, %65, %cst_23 [0] : vector<16x128xf32> to vector<128xf32>
    %67 = vector.shape_cast %66 : vector<128xf32> to vector<1x128xf32>
    %68 = arith.mulf %67, %54 : vector<1x128xf32>
    %cst_24 = arith.constant 1.000000e+01 : f32
    %69 = vector.broadcast %cst_24 : f32 to vector<1x128xf32>
    %70 = arith.addf %52, %69 : vector<1x128xf32>
    %71 = math.log %70 : vector<1x128xf32>
    %72 = arith.mulf %52, %71 : vector<1x128xf32>
    %73 = arith.divf %68, %72 : vector<1x128xf32>
    %cst_25 = arith.constant 0.000000e+00 : f32
    %74 = vector.broadcast %cst_25 : f32 to vector<1x128xf32>
    %75 = arith.cmpf ogt, %50, %74 : vector<1x128xf32>
    %cst_26 = arith.constant 0.000000e+00 : f32
    %76 = vector.broadcast %cst_26 : f32 to vector<1x128xf32>
    %77 = arith.select %75, %73, %76 : vector<1x128xi1>, vector<1x128xf32>
    %cst_27 = arith.constant 9.99999997E-7 : f32
    %78 = vector.broadcast %cst_27 : f32 to vector<1x128xf32>
    %79 = arith.maximumf %77, %78 : vector<1x128xf32>
    %80 = arith.mulf %57, %57 : vector<32x128xf32>
    %cst_28 = arith.constant dense<0.000000e+00> : vector<128xf32>
    %81 = vector.multi_reduction <add>, %80, %cst_28 [0] : vector<32x128xf32> to vector<128xf32>
    %82 = vector.shape_cast %81 : vector<128xf32> to vector<1x128xf32>
    %cst_29 = arith.constant 1.000000e-24 : f32
    %83 = vector.broadcast %cst_29 : f32 to vector<1x128xf32>
    %84 = arith.maximumf %82, %83 : vector<1x128xf32>
    %85 = math.rsqrt %84 : vector<1x128xf32>
    %86 = vector.broadcast %85 : vector<1x128xf32> to vector<32x128xf32>
    %87 = arith.mulf %57, %86 : vector<32x128xf32>
    %cst_30 = arith.constant dense<0.000000e+00> : vector<16x128xf32>
    %88 = tpu.matmul %8, %87, %cst_30 {dimension_numbers = #tpu.dot_dimension_numbers<[1], [0], [0], [1], [0, 0, 1, 1], [], []>} : vector<16x32xf32>, vector<32x128xf32>, vector<16x128xf32> -> vector<16x128xf32>
    %89 = tpu.reciprocal %79 {approx = true} : vector<1x128xf32> -> vector<1x128xf32>
    %90 = vector.broadcast %89 : vector<1x128xf32> to vector<16x128xf32>
    %91 = arith.mulf %88, %90 : vector<16x128xf32>
    %92 = vector.broadcast %18 : i32 to vector<1x128xi32>
    %93 = arith.cmpi slt, %11, %92 : vector<1x128xi32>
    %cst_31 = arith.constant -1.000000e+30 : f32
    %94 = vector.shape_cast %93 : vector<1x128xi1> to vector<1x128xi1>
    %95 = vector.broadcast %94 : vector<1x128xi1> to vector<16x128xi1>
    %96 = vector.broadcast %cst_31 : f32 to vector<16x128xf32>
    %97 = arith.select %95, %91, %96 : vector<16x128xi1>, vector<16x128xf32>
    %cst_32 = arith.constant dense<0xFF800000> : vector<16xf32>
    %98 = vector.multi_reduction <maximumf>, %97, %cst_32 [1] : vector<16x128xf32> to vector<16xf32>
    %99 = vector.shape_cast %98 : vector<16xf32> to vector<16x1xf32>
    %100 = vector.broadcast %99 : vector<16x1xf32> to vector<16x128xf32>
    %101 = arith.subf %97, %100 : vector<16x128xf32>
    %102 = math.exp %101 : vector<16x128xf32>
    %cst_33 = arith.constant dense<0.000000e+00> : vector<16xf32>
    %103 = vector.multi_reduction <add>, %102, %cst_33 [1] : vector<16x128xf32> to vector<16xf32>
    %104 = vector.shape_cast %103 : vector<16xf32> to vector<16x1xf32>
    %105 = math.log %104 : vector<16x1xf32>
    %106 = vector.broadcast %105 : vector<16x1xf32> to vector<16x128xf32>
    %107 = arith.subf %101, %106 : vector<16x128xf32>
    %108 = arith.mulf %107, %17 : vector<16x128xf32>
    %cst_34 = arith.constant dense<0.000000e+00> : vector<16xf32>
    %109 = vector.multi_reduction <add>, %108, %cst_34 [1] : vector<16x128xf32> to vector<16xf32>
    %110 = vector.shape_cast %109 : vector<16xf32> to vector<16x1xf32>
    %cst_35 = arith.constant 5.000000e-01 : f32
    %111 = vector.broadcast %cst_35 : f32 to vector<16x1xf32>
    %112 = arith.mulf %110, %111 : vector<16x1xf32>
    %113 = arith.subf %48, %112 : vector<16x1xf32>
    %114 = vector.extract_strided_slice %9 {offsets = [0, 1], sizes = [16, 1], strides = [1, 1]} : vector<16x2xi32> to vector<16x1xi32>
    %115 = vector.broadcast %114 : vector<16x1xi32> to vector<16x128xi32>
    %116 = arith.cmpi eq, %115, %10 : vector<16x128xi32>
    %117 = arith.extui %116 : vector<16x128xi1> to vector<16x128xi32>
    %118 = arith.sitofp %117 : vector<16x128xi32> to vector<16x128xf32>
    %c1 = arith.constant 1 : index
    %119 = memref.load %arg1[%c1] : memref<2xi32, #tpu.memory_space<smem>>
    %cst_36 = arith.constant dense<0.000000e+00> : vector<128xf32>
    %120 = vector.multi_reduction <add>, %118, %cst_36 [0] : vector<16x128xf32> to vector<128xf32>
    %121 = vector.shape_cast %120 : vector<128xf32> to vector<1x128xf32>
    %cst_37 = arith.constant 1.000000e+00 : f32
    %122 = vector.broadcast %cst_37 : f32 to vector<1x128xf32>
    %123 = arith.maximumf %121, %122 : vector<1x128xf32>
    %cst_38 = arith.constant 1.000000e+00 : f32
    %124 = vector.broadcast %cst_38 : f32 to vector<1x128xf32>
    %125 = arith.divf %124, %123 : vector<1x128xf32>
    %126 = vector.broadcast %125 : vector<1x128xf32> to vector<16x128xf32>
    %127 = arith.mulf %118, %126 : vector<16x128xf32>
    %cst_39 = arith.constant dense<0.000000e+00> : vector<32x128xf32>
    %128 = tpu.matmul %8, %127, %cst_39 {dimension_numbers = #tpu.dot_dimension_numbers<[0], [0], [1], [1], [0, 1, 1, 1], [], []>} : vector<16x32xf32>, vector<16x128xf32>, vector<32x128xf32> -> vector<32x128xf32>
    %cst_40 = arith.constant dense<0.000000e+00> : vector<16x32xf32>
    %129 = tpu.matmul %118, %128, %cst_40 {dimension_numbers = #tpu.dot_dimension_numbers<[1], [1], [0], [0], [0, 0, 1, 0], [], []>} : vector<16x128xf32>, vector<32x128xf32>, vector<16x32xf32> -> vector<16x32xf32>
    %130 = arith.subf %8, %129 : vector<16x32xf32>
    %131 = arith.mulf %130, %130 : vector<16x32xf32>
    %cst_41 = arith.constant dense<0.000000e+00> : vector<16xf32>
    %132 = vector.multi_reduction <add>, %131, %cst_41 [1] : vector<16x32xf32> to vector<16xf32>
    %133 = vector.shape_cast %132 : vector<16xf32> to vector<16x1xf32>
    %134 = math.sqrt %133 : vector<16x1xf32>
    %135 = vector.broadcast %134 : vector<16x1xf32> to vector<16x128xf32>
    %136 = arith.mulf %118, %135 : vector<16x128xf32>
    %cst_42 = arith.constant dense<0.000000e+00> : vector<128xf32>
    %137 = vector.multi_reduction <add>, %136, %cst_42 [0] : vector<16x128xf32> to vector<128xf32>
    %138 = vector.shape_cast %137 : vector<128xf32> to vector<1x128xf32>
    %139 = arith.mulf %138, %125 : vector<1x128xf32>
    %cst_43 = arith.constant 1.000000e+01 : f32
    %140 = vector.broadcast %cst_43 : f32 to vector<1x128xf32>
    %141 = arith.addf %123, %140 : vector<1x128xf32>
    %142 = math.log %141 : vector<1x128xf32>
    %143 = arith.mulf %123, %142 : vector<1x128xf32>
    %144 = arith.divf %139, %143 : vector<1x128xf32>
    %cst_44 = arith.constant 0.000000e+00 : f32
    %145 = vector.broadcast %cst_44 : f32 to vector<1x128xf32>
    %146 = arith.cmpf ogt, %121, %145 : vector<1x128xf32>
    %cst_45 = arith.constant 0.000000e+00 : f32
    %147 = vector.broadcast %cst_45 : f32 to vector<1x128xf32>
    %148 = arith.select %146, %144, %147 : vector<1x128xi1>, vector<1x128xf32>
    %cst_46 = arith.constant 9.99999997E-7 : f32
    %149 = vector.broadcast %cst_46 : f32 to vector<1x128xf32>
    %150 = arith.maximumf %148, %149 : vector<1x128xf32>
    %151 = arith.mulf %128, %128 : vector<32x128xf32>
    %cst_47 = arith.constant dense<0.000000e+00> : vector<128xf32>
    %152 = vector.multi_reduction <add>, %151, %cst_47 [0] : vector<32x128xf32> to vector<128xf32>
    %153 = vector.shape_cast %152 : vector<128xf32> to vector<1x128xf32>
    %cst_48 = arith.constant 1.000000e-24 : f32
    %154 = vector.broadcast %cst_48 : f32 to vector<1x128xf32>
    %155 = arith.maximumf %153, %154 : vector<1x128xf32>
    %156 = math.rsqrt %155 : vector<1x128xf32>
    %157 = vector.broadcast %156 : vector<1x128xf32> to vector<32x128xf32>
    %158 = arith.mulf %128, %157 : vector<32x128xf32>
    %cst_49 = arith.constant dense<0.000000e+00> : vector<16x128xf32>
    %159 = tpu.matmul %8, %158, %cst_49 {dimension_numbers = #tpu.dot_dimension_numbers<[1], [0], [0], [1], [0, 0, 1, 1], [], []>} : vector<16x32xf32>, vector<32x128xf32>, vector<16x128xf32> -> vector<16x128xf32>
    %160 = tpu.reciprocal %150 {approx = true} : vector<1x128xf32> -> vector<1x128xf32>
    %161 = vector.broadcast %160 : vector<1x128xf32> to vector<16x128xf32>
    %162 = arith.mulf %159, %161 : vector<16x128xf32>
    %163 = vector.broadcast %119 : i32 to vector<1x128xi32>
    %164 = arith.cmpi slt, %11, %163 : vector<1x128xi32>
    %cst_50 = arith.constant -1.000000e+30 : f32
    %165 = vector.shape_cast %164 : vector<1x128xi1> to vector<1x128xi1>
    %166 = vector.broadcast %165 : vector<1x128xi1> to vector<16x128xi1>
    %167 = vector.broadcast %cst_50 : f32 to vector<16x128xf32>
    %168 = arith.select %166, %162, %167 : vector<16x128xi1>, vector<16x128xf32>
    %cst_51 = arith.constant dense<0xFF800000> : vector<16xf32>
    %169 = vector.multi_reduction <maximumf>, %168, %cst_51 [1] : vector<16x128xf32> to vector<16xf32>
    %170 = vector.shape_cast %169 : vector<16xf32> to vector<16x1xf32>
    %171 = vector.broadcast %170 : vector<16x1xf32> to vector<16x128xf32>
    %172 = arith.subf %168, %171 : vector<16x128xf32>
    %173 = math.exp %172 : vector<16x128xf32>
    %cst_52 = arith.constant dense<0.000000e+00> : vector<16xf32>
    %174 = vector.multi_reduction <add>, %173, %cst_52 [1] : vector<16x128xf32> to vector<16xf32>
    %175 = vector.shape_cast %174 : vector<16xf32> to vector<16x1xf32>
    %176 = math.log %175 : vector<16x1xf32>
    %177 = vector.broadcast %176 : vector<16x1xf32> to vector<16x128xf32>
    %178 = arith.subf %172, %177 : vector<16x128xf32>
    %179 = arith.mulf %178, %118 : vector<16x128xf32>
    %cst_53 = arith.constant dense<0.000000e+00> : vector<16xf32>
    %180 = vector.multi_reduction <add>, %179, %cst_53 [1] : vector<16x128xf32> to vector<16xf32>
    %181 = vector.shape_cast %180 : vector<16xf32> to vector<16x1xf32>
    %cst_54 = arith.constant 5.000000e-01 : f32
    %182 = vector.broadcast %cst_54 : f32 to vector<16x1xf32>
    %183 = arith.mulf %181, %182 : vector<16x1xf32>
    %184 = arith.subf %113, %183 : vector<16x1xf32>
    %185 = tpu.iota {dimensions = array<i32: 0>} : vector<16x16xi32>
    %186 = tpu.iota {dimensions = array<i32: 1>} : vector<16x16xi32>
    %187 = arith.cmpi eq, %185, %186 : vector<16x16xi32>
    %cst_55 = arith.constant 0.000000e+00 : f32
    %188 = vector.shape_cast %184 : vector<16x1xf32> to vector<16x1xf32>
    %189 = vector.broadcast %188 : vector<16x1xf32> to vector<16x16xf32>
    %190 = vector.broadcast %cst_55 : f32 to vector<16x16xf32>
    %191 = arith.select %187, %189, %190 : vector<16x16xi1>, vector<16x16xf32>
    %cst_56 = arith.constant dense<0.000000e+00> : vector<16xf32>
    %192 = vector.multi_reduction <add>, %191, %cst_56 [0] : vector<16x16xf32> to vector<16xf32>
    %193 = vector.shape_cast %192 : vector<16xf32> to vector<1x16xf32>
    %c0_57 = arith.constant 0 : index
    %c0_58 = arith.constant 0 : index
    %194 = vector.load %arg4[%c0_57, %c0_58] : memref<1x16xf32, #tpu.memory_space<vmem>>, vector<1x16xf32>
    tpu.vector_store %arg4[%c0_57, %c0_58], %193 {strides = array<i32>} : memref<1x16xf32, #tpu.memory_space<vmem>>, vector<1x16xf32>,
    return
  }
  func.func @transform_0(%arg0: i32, %arg1: memref<2xi32, #tpu.memory_space<smem>>) -> (i32, i32) {
    %c0_i32 = arith.constant 0 : i32
    %c0_i32_0 = arith.constant 0 : i32
    %c0_i32_1 = arith.constant 0 : i32
    return %c0_i32, %c0_i32_0 : i32, i32
  }
  func.func @transform_1(%arg0: i32, %arg1: memref<2xi32, #tpu.memory_space<smem>>) -> (i32, i32) {
    %c0_i32 = arith.constant 0 : i32
    %c0_i32_0 = arith.constant 0 : i32
    %c0_i32_1 = arith.constant 0 : i32
    return %c0_i32, %c0_i32_0 : i32, i32
  }
  func.func @transform_2(%arg0: i32, %arg1: memref<2xi32, #tpu.memory_space<smem>>) -> (i32, i32) {
    %c0_i32 = arith.constant 0 : i32
    %c0_i32_0 = arith.constant 0 : i32
    %c0_i32_1 = arith.constant 0 : i32
    return %c0_i32, %c0_i32_0 : i32, i32
  }
}

</mosaic_0001>

<llo_original>
// kernel: pcl_loss.1
$region0: #{pcl_loss.1}
  #allocation0 [shape = 'u32[]', space=smem, size = 0x4, offset = 0x4, fixed_abs, tag = 'smem constant byte address 0x4 - core index']
  #allocation1 [shape = 'u32[72,128]{1,0:T(1,128)}', space=vmem, size = 0x9000, scoped, tag = 'internal scratch']
  #allocation2 [shape = 's32[1]{0}', space=sflag, size = 0x4, scoped, tag = 'scoped memory for pcl_loss.1']
  #allocation3 [shape = 'u8[512]{0}', space=smem, size = 0x200, scoped, tag = 'prefetched SMEM operand 0']
  %s0 = inlined_call_operand.vmem [shape: s32[2], index: 0, kind: input, shape index: {}]
  %s1 = inlined_call_operand.vmem [shape: f32[16,32], index: 1, kind: input, shape index: {}]
  %s2 = inlined_call_operand.vmem [shape: s32[16,2], index: 2, kind: input, shape index: {}]
  %s3 = inlined_call_operand.hbm [shape: f32[1,16], index: 3, kind: output, shape index: {}]
  %s4 = sld [smem:[#allocation0]]
  $region18: #{pcl_loss.1} parent=0
    _
  %s6 = ssub.s32 1, %s4
  %s7 = scalar_select 0, %s6, %s4
  %s9 = sshll.u32 %s0, 4
  %s10 = int_to_ptr.vmem [resolvable:$true] %s9
  %12 = dma.vmem_to_smem %s10, 16, [#allocation3], [#allocation2]
  %14 = dma.done [#allocation2], 16
  %15 = sfence
  $region1: #{pcl_loss.1} parent=0
    #allocation4 [shape = 'u8[512]{0}', space=vmem, size = 0x400, scoped, tag = 'output window, operand 0, single buffered']
    #allocation5 [shape = 's32[1]{0}', space=sflag, size = 0x4, scoped, tag = 'scoped memory for pcl_loss.1']
    %16 = vsyncpa [#allocation5], 0
    // Predicated region
    $region2: #{pcl_loss.1} parent=1 // pred_check
      _
    $region3: #{pcl_loss.1} parent=1 // pred_check_branch
      %18 = sbr.rel (0) target = $region5
    $region4: #{pcl_loss.1} parent=1 // pred_region
      _
    $region5: #{pcl_loss.1} parent=1 // pred_fallthru
      _
    // Predicated region
    $region6: #{pcl_loss.1} parent=1 // pred_check
      _
    $region7: #{pcl_loss.1} parent=1 // pred_check_branch
      %20 = sbr.rel (0) target = $region9
    $region8: #{pcl_loss.1} parent=1 // pred_region
      _
    $region9: #{pcl_loss.1} parent=1 // pred_fallthru
      _
    %v21 = vld [vmem:[%s1] sm:$0xff]
    %v22 = vld [vmem:[%s1 + $0x8] sm:$0xff]
    %v23 = vmul.f32 %v21, %v21
    %v24 = vmul.f32 %v22, %v22
    %vm25 = vcmask 261120
    %v26 = vsel %vm25, %v23, 0.0
    %27 = vadd.xlane.f32.xlu0 %v26
    %v28 = vpop.xlane.xlu0 %27
    %v29 = vsel %vm25, %v24, 0.0
    %30 = vadd.xlane.f32.xlu0 %v29
    %v31 = vpop.xlane.xlu0 %30
    %v32 = vmax.f32 %v28, 1e-24
    %v33 = vmax.f32 %v31, 1e-24
    %v34 = vrsqrt.pop %v32
    %v35 = vmul.f32 %v34, %v32
    %v36 = vmul.f32 %v35, %v34
    %v37 = vmul.f32 0.5, %v36
    %v38 = vsub.f32 1.5, %v37
    %v39 = vmul.f32 %v34, %v38
    %vm40 = vweird.f32 %v32
    %vm41 = vweird.f32 %v34
    %vm42 = vmor %vm40, %vm41
    %v43 = vsel %vm42, %v34, %v39
    %v44 = vrsqrt.pop %v33
    %v45 = vmul.f32 %v44, %v33
    %v46 = vmul.f32 %v45, %v44
    %v47 = vmul.f32 0.5, %v46
    %v48 = vsub.f32 1.5, %v47
    %v49 = vmul.f32 %v44, %v48
    %vm50 = vweird.f32 %v33
    %vm51 = vweird.f32 %v44
    %vm52 = vmor %vm50, %vm51
    %v53 = vsel %vm52, %v44, %v49
    %v54 = vmul.f32 %v21, %v43
    %v55 = vmul.f32 %v22, %v53
    %v56 = vld [vmem:[%s2] sm:$0xff]
    %v57 = vld [vmem:[%s2 + $0x8] sm:$0xff]
    %v58 = vlaneseq
    %v59 = vand.u32 %v58, 127
    %60 = vset.pattern.permute.xlu0 0
    %61 = vperm.xlu0 %60, %v56
    %v62 = vpop.permute.xlu0 %61
    %63 = vset.pattern.permute.xlu0 0
    %64 = vperm.xlu0 %63, %v57
    %v65 = vpop.permute.xlu0 %64
    %vm66 = vcmp.eq.s32.totalorder %v62, %v59
    %vm67 = vcmp.eq.s32.totalorder %v65, %v59
    %v68 = vsel %vm66, 1, 0
    %v69 = vsel %vm67, 1, 0
    %v70 = vcvt.s32.f32 %v68
    %v71 = vcvt.s32.f32 %v69
    %s72 = sld [smem:[#allocation3]]
    %v74 = vsel %vm25, %v54, 0
    %v77 = vsel %vm25, %v55, 0
    %79 = vmatpush.xpose.msra.mxu0 0.0
    %80 = vmatpush.xpose.msra.mxu0 0.0
    %81 = vmatpush.xpose.msra.mxu0 0.0
    %82 = vmatpush.xpose.msra.mxu0 0.0
    %83 = vmatpush.xpose.msra.mxu0 0.0
    %84 = vmatpush.xpose.msra.mxu0 0.0
    %85 = vmatpush.xpose.msra.mxu0 0.0
    %86 = vmatpush.xpose.msra.mxu0 0.0
    %87 = vmatpush.xpose.msra.mxu0 0.0
    %88 = vmatpush.xpose.msra.mxu0 0.0
    %89 = vmatpush.xpose.msra.mxu0 0.0
    %90 = vmatpush.xpose.msra.mxu0 0.0
    %91 = vmatpush.xpose.msra.mxu0 0.0
    %92 = vmatpush.xpose.msra.mxu0 0.0
    %93 = vmatpush.xpose.msra.mxu0 %v77
    %94 = vmatpush.xpose.msra.mxu0 %v74
    %95 = vmatmul.f32.gmra.mxu0 %v74
    %v96 = vpop.f32.mrf.mxu0
    %v97 = vadd.f32 0.0, %v96
    %98 = vmatmul.f32.gmra.mxu0 %v77
    %v99 = vpop.f32.mrf.mxu0
    %v100 = vadd.f32 0.0, %v99
    %101 = vdwg.mxu0
    %v102 = vmul.f32 %v97, 14.285714
    %v103 = vmul.f32 %v100, 14.285714
    %104 = vmatpush.xpose.msra.mxu0 0.0
    %105 = vmatpush.xpose.msra.mxu0 0.0
    %106 = vmatpush.xpose.msra.mxu0 0.0
    %107 = vmatpush.xpose.msra.mxu0 0.0
    %108 = vmatpush.xpose.msra.mxu0 0.0
    %109 = vmatpush.xpose.msra.mxu0 0.0
    %110 = vmatpush.xpose.msra.mxu0 0.0
    %111 = vmatpush.xpose.msra.mxu0 0.0
    %112 = vmatpush.xpose.msra.mxu0 0.0
    %113 = vmatpush.xpose.msra.mxu0 0.0
    %114 = vmatpush.xpose.msra.mxu0 0.0
    %115 = vmatpush.xpose.msra.mxu0 0.0
    %116 = vmatpush.xpose.msra.mxu0 0.0
    %117 = vmatpush.xpose.msra.mxu0 0.0
    %118 = vmatpush.xpose.msra.mxu0 %v71
    %119 = vmatpush.xpose.msra.mxu0 %v70
    %120 = vmatmul.f32.gmra.mxu0 %v70
    %v121 = vpop.f32.mrf.mxu0
    %v122 = vadd.f32 0.0, %v121
    %123 = vmatmul.f32.gmra.mxu0 %v71
    %v124 = vpop.f32.mrf.mxu0
    %v125 = vadd.f32 0.0, %v124
    %126 = vdwg.mxu0
    %vm127 = vcmask 130048
    %v128 = vsel %vm127, %v102, -inf
    %129 = vmax.xlane.f32.xlu0 %v128
    %v130 = vpop.xlane.xlu0 %129
    %v131 = vsel %vm127, %v103, -inf
    %132 = vmax.xlane.f32.xlu0 %v131
    %v133 = vpop.xlane.xlu0 %132
    %v134 = vsub.f32 %v102, %v130
    %v135 = vsub.f32 %v103, %v133
    %v136 = vmul.f32 %v134, 1.442695
    %v137 = vpow.pop %v136
    %v138 = vmul.f32 %v135, 1.442695
    %v139 = vpow.pop %v138
    %v140 = vsel %vm127, %v137, 0.0
    %141 = vadd.xlane.f32.xlu0 %v140
    %v142 = vpop.xlane.xlu0 %141
    %v143 = vsel %vm127, %v139, 0.0
    %144 = vadd.xlane.f32.xlu0 %v143
    %v145 = vpop.xlane.xlu0 %144
    %v146 = vlog2.pop %v142
    %v147 = vmul.f32 %v146, 0.6931472
    %v148 = vlog2.pop %v145
    %v149 = vmul.f32 %v148, 0.6931472
    %v150 = vsub.f32 %v134, %v147
    %v151 = vsub.f32 %v135, %v149
    %v152 = vsel %vm127, %v122, 0.0
    %153 = vadd.xlane.f32.xlu0 %v152
    %v154 = vpop.xlane.xlu0 %153
    %v155 = vsel %vm127, %v125, 0.0
    %156 = vadd.xlane.f32.xlu0 %v155
    %v157 = vpop.xlane.xlu0 %156
    %v158 = vmul.f32 %v150, %v122
    %v159 = vmul.f32 %v151, %v125
    %v160 = vsel %vm127, %v158, 0.0
    %161 = vadd.xlane.f32.xlu0 %v160
    %v162 = vpop.xlane.xlu0 %161
    %v163 = vsel %vm127, %v159, 0.0
    %164 = vadd.xlane.f32.xlu0 %v163
    %v165 = vpop.xlane.xlu0 %164
    %vm166 = vcmp.gt.f32.partialorder %v154, 0.0
    %vm167 = vcmp.gt.f32.partialorder %v157, 0.0
    %v168 = vsub.f32 0.0, %v162
    %v169 = vsub.f32 0.0, %v165
    %v170 = vmax.f32 %v154, 1.0
    %v171 = vmax.f32 %v157, 1.0
    %v172 = vrcp.pop %v170
    %v173 = vrcp.pop %v171
    %v174 = vmul.f32 %v168, %v172
    %v175 = vmul.f32 %v169, %v173
    %v176 = vsel %vm166, %v174, 0.0
    %v177 = vsel %vm167, %v175, 0.0
    %v178 = vadd.f32 %v176, 0.0
    %v179 = vadd.f32 %v177, 0.0
    %v180 = vadd.f32 %v70, %v71
    %v181 = vrot.slane %v180, 4
    %v182 = vadd.f32 %v180, %v181
    %v183 = vrot.slane %v182, 2
    %v184 = vadd.f32 %v182, %v183
    %v185 = vrot.slane %v184, 1
    %v186 = vadd.f32 %v184, %v185
    %v187 = vmax.f32 %v186, 1.0
    %v188 = vrcp.pop %v187
    %v189 = vmul.f32 %v187, %v188
    %v190 = vsub.f32 1.0, %v189
    %v191 = vmul.f32 %v188, %v190
    %v192 = vadd.f32 %v188, %v191
    %vm193 = vweird.f32 %v187
    %vm194 = vweird.f32 %v188
    %vm195 = vmor %vm193, %vm194
    %v196 = vsel %vm195, %v188, %v192
    %v197 = vand.u32 2147483647, %v187
    %vm198 = vcmp.eq.f32.partialorder %v197, 8.507059e+37
    %v199 = vand.u32 %v187, 2147483648
    %v200 = vor.u32 1.1754944e-38, %v199
    %v201 = vsel %vm198, %v200, %v196
    %v202 = vmul.f32 1.0, %v201
    %v203 = vmul.f32 %v70, %v202
    %v204 = vmul.f32 %v71, %v202
    %205 = vxpose.xlu0.b32.start [1/16] %v54, 128
    %206 = vxpose.xlu0.b32.cont [2/16] %v55, 128
    %207 = vxpose.xlu0.b32.cont [3/16] 0.0, 128
    %208 = vxpose.xlu0.b32.cont [4/16] 0.0, 128
    %209 = vxpose.xlu0.b32.cont [5/16] 0.0, 128
    %210 = vxpose.xlu0.b32.cont [6/16] 0.0, 128
    %211 = vxpose.xlu0.b32.cont [7/16] 0.0, 128
    %212 = vxpose.xlu0.b32.cont [8/16] 0.0, 128
    %213 = vxpose.xlu0.b32.cont [9/16] 0.0, 128
    %214 = vxpose.xlu0.b32.cont [10/16] 0.0, 128
    %215 = vxpose.xlu0.b32.cont [11/16] 0.0, 128
    %216 = vxpose.xlu0.b32.cont [12/16] 0.0, 128
    %217 = vxpose.xlu0.b32.cont [13/16] 0.0, 128
    %218 = vxpose.xlu0.b32.cont [14/16] 0.0, 128
    %219 = vxpose.xlu0.b32.cont [15/16] 0.0, 128
    %220 = vxpose.xlu0.b32.end [16/16] 0.0, 128
    %v221 = vpop.trf.xlu0
    %v222 = vpop.trf.xlu0
    %v223 = vpop.trf.xlu0
    %v224 = vpop.trf.xlu0
    %v225 = vpop.trf.xlu0
    %v226 = vpop.trf.xlu0
    %v227 = vpop.trf.xlu0
    %v228 = vpop.trf.xlu0
    %v229 = vpop.trf.xlu0
    %v230 = vpop.trf.xlu0
    %v231 = vpop.trf.xlu0
    %v232 = vpop.trf.xlu0
    %v233 = vpop.trf.xlu0
    %v234 = vpop.trf.xlu0
    %v235 = vpop.trf.xlu0
    %v236 = vpop.trf.xlu0
    %v238 = vsel %vm127, %v221, 0
    %v241 = vsel %vm127, %v222, 0
    %v244 = vsel %vm127, %v223, 0
    %v247 = vsel %vm127, %v224, 0
    %249 = vmatpush.msra.mxu0 0.0
    %250 = vmatpush.msra.mxu0 0.0
    %251 = vmatpush.msra.mxu0 0.0
    %252 = vmatpush.msra.mxu0 0.0
    %253 = vmatpush.msra.mxu0 0.0
    %254 = vmatpush.msra.mxu0 0.0
    %255 = vmatpush.msra.mxu0 0.0
    %256 = vmatpush.msra.mxu0 0.0
    %257 = vmatpush.msra.mxu0 0.0
    %258 = vmatpush.msra.mxu0 0.0
    %259 = vmatpush.msra.mxu0 0.0
    %260 = vmatpush.msra.mxu0 0.0
    %261 = vmatpush.msra.mxu0 0.0
    %262 = vmatpush.msra.mxu0 0.0
    %263 = vmatpush.msra.mxu0 %v204
    %264 = vmatpush.msra.mxu0 %v203
    %265 = vmatmul.f32.gmra.mxu0 %v238
    %v266 = vpop.f32.mrf.mxu0
    %v267 = vadd.f32 0.0, %v266
    %268 = vmatmul.f32.gmra.mxu0 %v241
    %v269 = vpop.f32.mrf.mxu0
    %v270 = vadd.f32 0.0, %v269
    %271 = vmatmul.f32.gmra.mxu0 %v244
    %v272 = vpop.f32.mrf.mxu0
    %v273 = vadd.f32 0.0, %v272
    %274 = vmatmul.f32.gmra.mxu0 %v247
    %v275 = vpop.f32.mrf.mxu0
    %v276 = vadd.f32 0.0, %v275
    %277 = vdwg.mxu0
    %278 = vmatpush.xpose.msra.mxu0 0.0
    %279 = vmatpush.xpose.msra.mxu0 0.0
    %280 = vmatpush.xpose.msra.mxu0 0.0
    %281 = vmatpush.xpose.msra.mxu0 0.0
    %282 = vmatpush.xpose.msra.mxu0 0.0
    %283 = vmatpush.xpose.msra.mxu0 0.0
    %284 = vmatpush.xpose.msra.mxu0 0.0
    %285 = vmatpush.xpose.msra.mxu0 0.0
    %286 = vmatpush.xpose.msra.mxu0 0.0
    %287 = vmatpush.xpose.msra.mxu0 0.0
    %288 = vmatpush.xpose.msra.mxu0 0.0
    %289 = vmatpush.xpose.msra.mxu0 0.0
    %290 = vmatpush.xpose.msra.mxu0 %v276
    %291 = vmatpush.xpose.msra.mxu0 %v273
    %292 = vmatpush.xpose.msra.mxu0 %v270
    %293 = vmatpush.xpose.msra.mxu0 %v267
    %294 = vmatmul.f32.gmra.mxu0 %v70
    %v295 = vpop.f32.mrf.mxu0
    %v296 = vadd.f32 0.0, %v295
    %297 = vmatmul.f32.gmra.mxu0 %v71
    %v298 = vpop.f32.mrf.mxu0
    %v299 = vadd.f32 0.0, %v298
    %300 = vdwg.mxu0
    %v301 = vsub.f32 %v54, %v296
    %v302 = vsub.f32 %v55, %v299
    %v303 = vmul.f32 %v301, %v301
    %v304 = vmul.f32 %v302, %v302
    %v305 = vsel %vm25, %v303, 0.0
    %306 = vadd.xlane.f32.xlu0 %v305
    %v307 = vpop.xlane.xlu0 %306
    %v308 = vsel %vm25, %v304, 0.0
    %309 = vadd.xlane.f32.xlu0 %v308
    %v310 = vpop.xlane.xlu0 %309
    %v311 = vrsqrt.pop %v307
    %v312 = vmul.f32 %v311, %v307
    %v313 = vmul.f32 %v312, %v311
    %v314 = vmul.f32 0.5, %v313
    %v315 = vsub.f32 1.5, %v314
    %v316 = vmul.f32 %v311, %v315
    %v317 = vmul.f32 %v307, %v316
    %vm318 = vcmp.eq.f32.partialorder %v307, inf
    %v319 = vsel %vm318, %v307, %v317
    %vm320 = vcmp.eq.f32.partialorder %v307, 0.0
    %v321 = vand.u32 %v307, 2147483648
    %v322 = vsel %vm320, %v321, %v319
    %v323 = vrsqrt.pop %v310
    %v324 = vmul.f32 %v323, %v310
    %v325 = vmul.f32 %v324, %v323
    %v326 = vmul.f32 0.5, %v325
    %v327 = vsub.f32 1.5, %v326
    %v328 = vmul.f32 %v323, %v327
    %v329 = vmul.f32 %v310, %v328
    %vm330 = vcmp.eq.f32.partialorder %v310, inf
    %v331 = vsel %vm330, %v310, %v329
    %vm332 = vcmp.eq.f32.partialorder %v310, 0.0
    %v333 = vand.u32 %v310, 2147483648
    %v334 = vsel %vm332, %v333, %v331
    %v335 = vmul.f32 %v70, %v322
    %v336 = vmul.f32 %v71, %v334
    %v337 = vadd.f32 %v335, %v336
    %v338 = vrot.slane %v337, 4
    %v339 = vadd.f32 %v337, %v338
    %v340 = vrot.slane %v339, 2
    %v341 = vadd.f32 %v339, %v340
    %v342 = vrot.slane %v341, 1
    %v343 = vadd.f32 %v341, %v342
    %v344 = vmul.f32 %v343, %v202
    %v345 = vadd.f32 %v187, 10.0
    %v346 = vlog2.pop %v345
    %v347 = vmul.f32 %v346, 0.6931472
    %v348 = vmul.f32 %v187, %v347
    %v349 = vrcp.pop %v348
    %v350 = vmul.f32 %v348, %v349
    %v351 = vsub.f32 1.0, %v350
    %v352 = vmul.f32 %v349, %v351
    %v353 = vadd.f32 %v349, %v352
    %vm354 = vweird.f32 %v348
    %vm355 = vweird.f32 %v349
    %vm356 = vmor %vm354, %vm355
    %v357 = vsel %vm356, %v349, %v353
    %v358 = vand.u32 2147483647, %v348
    %vm359 = vcmp.eq.f32.partialorder %v358, 8.507059e+37
    %v360 = vand.u32 %v348, 2147483648
    %v361 = vor.u32 1.1754944e-38, %v360
    %v362 = vsel %vm359, %v361, %v357
    %v363 = vmul.f32 %v344, %v362
    %vm364 = vcmp.gt.f32.partialorder %v186, 0.0
    %v365 = vsel %vm364, %v363, 0.0
    %v366 = vmax.f32 %v365, 1e-06
    %v367 = vmul.f32 %v267, %v267
    %v368 = vmul.f32 %v270, %v270
    %v369 = vmul.f32 %v273, %v273
    %v370 = vmul.f32 %v276, %v276
    %v371 = vadd.f32 %v367, %v368
    %v372 = vadd.f32 %v371, %v369
    %v373 = vadd.f32 %v372, %v370
    %v374 = vrot.slane %v373, 4
    %v375 = vadd.f32 %v373, %v374
    %v376 = vrot.slane %v375, 2
    %v377 = vadd.f32 %v375, %v376
    %v378 = vrot.slane %v377, 1
    %v379 = vadd.f32 %v377, %v378
    %v380 = vmax.f32 %v379, 1e-24
    %v381 = vrsqrt.pop %v380
    %v382 = vmul.f32 %v381, %v380
    %v383 = vmul.f32 %v382, %v381
    %v384 = vmul.f32 0.5, %v383
    %v385 = vsub.f32 1.5, %v384
    %v386 = vmul.f32 %v381, %v385
    %vm387 = vweird.f32 %v380
    %vm388 = vweird.f32 %v381
    %vm389 = vmor %vm387, %vm388
    %v390 = vsel %vm389, %v381, %v386
    %v391 = vmul.f32 %v267, %v390
    %v392 = vmul.f32 %v270, %v390
    %v393 = vmul.f32 %v273, %v390
    %v394 = vmul.f32 %v276, %v390
    %395 = vmatpush.msra.mxu0 0.0
    %396 = vmatpush.msra.mxu0 0.0
    %397 = vmatpush.msra.mxu0 0.0
    %398 = vmatpush.msra.mxu0 0.0
    %399 = vmatpush.msra.mxu0 0.0
    %400 = vmatpush.msra.mxu0 0.0
    %401 = vmatpush.msra.mxu0 0.0
    %402 = vmatpush.msra.mxu0 0.0
    %403 = vmatpush.msra.mxu0 0.0
    %404 = vmatpush.msra.mxu0 0.0
    %405 = vmatpush.msra.mxu0 0.0
    %406 = vmatpush.msra.mxu0 0.0
    %407 = vmatpush.msra.mxu0 %v394
    %408 = vmatpush.msra.mxu0 %v393
    %409 = vmatpush.msra.mxu0 %v392
    %410 = vmatpush.msra.mxu0 %v391
    %411 = vmatmul.f32.gmra.mxu0 %v74
    %v412 = vpop.f32.mrf.mxu0
    %v413 = vadd.f32 0.0, %v412
    %414 = vmatmul.f32.gmra.mxu0 %v77
    %v415 = vpop.f32.mrf.mxu0
    %v416 = vadd.f32 0.0, %v415
    %417 = vdwg.mxu0
    %v418 = vrcp.pop %v366
    %v419 = vmul.f32 %v413, %v418
    %v420 = vmul.f32 %v416, %v418
    %v421 = vstv %s72
    %vm422 = vcmp.lt.s32.totalorder %v59, %v421
    %v423 = vsel %vm422, 1, 0
    %vm424 = vcmp.eq.s32.totalorder %v423, 1
    %v425 = vsel %vm424, %v419, -1e+30
    %v426 = vsel %vm424, %v420, -1e+30
    %427 = vmax.xlane.f32.xlu0 %v425
    %v428 = vpop.xlane.xlu0 %427
    %429 = vmax.xlane.f32.xlu0 %v426
    %v430 = vpop.xlane.xlu0 %429
    %v431 = vsub.f32 %v425, %v428
    %v432 = vsub.f32 %v426, %v430
    %v433 = vmul.f32 %v431, 1.442695
    %v434 = vpow.pop %v433
    %v435 = vmul.f32 %v432, 1.442695
    %v436 = vpow.pop %v435
    %437 = vadd.xlane.f32.xlu0 %v434
    %v438 = vpop.xlane.xlu0 %437
    %439 = vadd.xlane.f32.xlu0 %v436
    %v440 = vpop.xlane.xlu0 %439
    %v441 = vlog2.pop %v438
    %v442 = vmul.f32 %v441, 0.6931472
    %v443 = vlog2.pop %v440
    %v444 = vmul.f32 %v443, 0.6931472
    %v445 = vsub.f32 %v431, %v442
    %v446 = vsub.f32 %v432, %v444
    %v447 = vmul.f32 %v445, %v70
    %v448 = vmul.f32 %v446, %v71
    %449 = vadd.xlane.f32.xlu0 %v447
    %v450 = vpop.xlane.xlu0 %449
    %451 = vadd.xlane.f32.xlu0 %v448
    %v452 = vpop.xlane.xlu0 %451
    %v453 = vmul.f32 %v450, 0.5
    %v454 = vmul.f32 %v452, 0.5
    %v455 = vsub.f32 %v178, %v453
    %v456 = vsub.f32 %v179, %v454
    %457 = vset.pattern.permute.xlu0 1
    %458 = vperm.xlu0 %457, %v56
    %v459 = vpop.permute.xlu0 %458
    %460 = vset.pattern.permute.xlu0 1
    %461 = vperm.xlu0 %460, %v57
    %v462 = vpop.permute.xlu0 %461
    %vm463 = vcmp.eq.s32.totalorder %v459, %v59
    %vm464 = vcmp.eq.s32.totalorder %v462, %v59
    %v465 = vsel %vm463, 1, 0
    %v466 = vsel %vm464, 1, 0
    %v467 = vcvt.s32.f32 %v465
    %v468 = vcvt.s32.f32 %v466
    %s469 = sld [smem:[#allocation3 + $0x1]]
    %v470 = vadd.f32 %v467, %v468
    %v471 = vrot.slane %v470, 4
    %v472 = vadd.f32 %v470, %v471
    %v473 = vrot.slane %v472, 2
    %v474 = vadd.f32 %v472, %v473
    %v475 = vrot.slane %v474, 1
    %v476 = vadd.f32 %v474, %v475
    %v477 = vmax.f32 %v476, 1.0
    %v478 = vrcp.pop %v477
    %v479 = vmul.f32 %v477, %v478
    %v480 = vsub.f32 1.0, %v479
    %v481 = vmul.f32 %v478, %v480
    %v482 = vadd.f32 %v478, %v481
    %vm483 = vweird.f32 %v477
    %vm484 = vweird.f32 %v478
    %vm485 = vmor %vm483, %vm484
    %v486 = vsel %vm485, %v478, %v482
    %v487 = vand.u32 2147483647, %v477
    %vm488 = vcmp.eq.f32.partialorder %v487, 8.507059e+37
    %v489 = vand.u32 %v477, 2147483648
    %v490 = vor.u32 1.1754944e-38, %v489
    %v491 = vsel %vm488, %v490, %v486
    %v492 = vmul.f32 1.0, %v491
    %v493 = vmul.f32 %v467, %v492
    %v494 = vmul.f32 %v468, %v492
    %495 = vmatpush.msra.mxu0 0.0
    %496 = vmatpush.msra.mxu0 0.0
    %497 = vmatpush.msra.mxu0 0.0
    %498 = vmatpush.msra.mxu0 0.0
    %499 = vmatpush.msra.mxu0 0.0
    %500 = vmatpush.msra.mxu0 0.0
    %501 = vmatpush.msra.mxu0 0.0
    %502 = vmatpush.msra.mxu0 0.0
    %503 = vmatpush.msra.mxu0 0.0
    %504 = vmatpush.msra.mxu0 0.0
    %505 = vmatpush.msra.mxu0 0.0
    %506 = vmatpush.msra.mxu0 0.0
    %507 = vmatpush.msra.mxu0 0.0
    %508 = vmatpush.msra.mxu0 0.0
    %509 = vmatpush.msra.mxu0 %v494
    %510 = vmatpush.msra.mxu0 %v493
    %511 = vmatmul.f32.gmra.mxu0 %v238
    %v512 = vpop.f32.mrf.mxu0
    %v513 = vadd.f32 0.0, %v512
    %514 = vmatmul.f32.gmra.mxu0 %v241
    %v515 = vpop.f32.mrf.mxu0
    %v516 = vadd.f32 0.0, %v515
    %517 = vmatmul.f32.gmra.mxu0 %v244
    %v518 = vpop.f32.mrf.mxu0
    %v519 = vadd.f32 0.0, %v518
    %520 = vmatmul.f32.gmra.mxu0 %v247
    %v521 = vpop.f32.mrf.mxu0
    %v522 = vadd.f32 0.0, %v521
    %523 = vdwg.mxu0
    %524 = vmatpush.xpose.msra.mxu0 0.0
    %525 = vmatpush.xpose.msra.mxu0 0.0
    %526 = vmatpush.xpose.msra.mxu0 0.0
    %527 = vmatpush.xpose.msra.mxu0 0.0
    %528 = vmatpush.xpose.msra.mxu0 0.0
    %529 = vmatpush.xpose.msra.mxu0 0.0
    %530 = vmatpush.xpose.msra.mxu0 0.0
    %531 = vmatpush.xpose.msra.mxu0 0.0
    %532 = vmatpush.xpose.msra.mxu0 0.0
    %533 = vmatpush.xpose.msra.mxu0 0.0
    %534 = vmatpush.xpose.msra.mxu0 0.0
    %535 = vmatpush.xpose.msra.mxu0 0.0
    %536 = vmatpush.xpose.msra.mxu0 %v522
    %537 = vmatpush.xpose.msra.mxu0 %v519
    %538 = vmatpush.xpose.msra.mxu0 %v516
    %539 = vmatpush.xpose.msra.mxu0 %v513
    %540 = vmatmul.f32.gmra.mxu0 %v467
    %v541 = vpop.f32.mrf.mxu0
    %v542 = vadd.f32 0.0, %v541
    %543 = vmatmul.f32.gmra.mxu0 %v468
    %v544 = vpop.f32.mrf.mxu0
    %v545 = vadd.f32 0.0, %v544
    %546 = vdwg.mxu0
    %v547 = vsub.f32 %v54, %v542
    %v548 = vsub.f32 %v55, %v545
    %v549 = vmul.f32 %v547, %v547
    %v550 = vmul.f32 %v548, %v548
    %v551 = vsel %vm25, %v549, 0.0
    %552 = vadd.xlane.f32.xlu0 %v551
    %v553 = vpop.xlane.xlu0 %552
    %v554 = vsel %vm25, %v550, 0.0
    %555 = vadd.xlane.f32.xlu0 %v554
    %v556 = vpop.xlane.xlu0 %555
    %v557 = vrsqrt.pop %v553
    %v558 = vmul.f32 %v557, %v553
    %v559 = vmul.f32 %v558, %v557
    %v560 = vmul.f32 0.5, %v559
    %v561 = vsub.f32 1.5, %v560
    %v562 = vmul.f32 %v557, %v561
    %v563 = vmul.f32 %v553, %v562
    %vm564 = vcmp.eq.f32.partialorder %v553, inf
    %v565 = vsel %vm564, %v553, %v563
    %vm566 = vcmp.eq.f32.partialorder %v553, 0.0
    %v567 = vand.u32 %v553, 2147483648
    %v568 = vsel %vm566, %v567, %v565
    %v569 = vrsqrt.pop %v556
    %v570 = vmul.f32 %v569, %v556
    %v571 = vmul.f32 %v570, %v569
    %v572 = vmul.f32 0.5, %v571
    %v573 = vsub.f32 1.5, %v572
    %v574 = vmul.f32 %v569, %v573
    %v575 = vmul.f32 %v556, %v574
    %vm576 = vcmp.eq.f32.partialorder %v556, inf
    %v577 = vsel %vm576, %v556, %v575
    %vm578 = vcmp.eq.f32.partialorder %v556, 0.0
    %v579 = vand.u32 %v556, 2147483648
    %v580 = vsel %vm578, %v579, %v577
    %v581 = vmul.f32 %v467, %v568
    %v582 = vmul.f32 %v468, %v580
    %v583 = vadd.f32 %v581, %v582
    %v584 = vrot.slane %v583, 4
    %v585 = vadd.f32 %v583, %v584
    %v586 = vrot.slane %v585, 2
    %v587 = vadd.f32 %v585, %v586
    %v588 = vrot.slane %v587, 1
    %v589 = vadd.f32 %v587, %v588
    %v590 = vmul.f32 %v589, %v492
    %v591 = vadd.f32 %v477, 10.0
    %v592 = vlog2.pop %v591
    %v593 = vmul.f32 %v592, 0.6931472
    %v594 = vmul.f32 %v477, %v593
    %v595 = vrcp.pop %v594
    %v596 = vmul.f32 %v594, %v595
    %v597 = vsub.f32 1.0, %v596
    %v598 = vmul.f32 %v595, %v597
    %v599 = vadd.f32 %v595, %v598
    %vm600 = vweird.f32 %v594
    %vm601 = vweird.f32 %v595
    %vm602 = vmor %vm600, %vm601
    %v603 = vsel %vm602, %v595, %v599
    %v604 = vand.u32 2147483647, %v594
    %vm605 = vcmp.eq.f32.partialorder %v604, 8.507059e+37
    %v606 = vand.u32 %v594, 2147483648
    %v607 = vor.u32 1.1754944e-38, %v606
    %v608 = vsel %vm605, %v607, %v603
    %v609 = vmul.f32 %v590, %v608
    %vm610 = vcmp.gt.f32.partialorder %v476, 0.0
    %v611 = vsel %vm610, %v609, 0.0
    %v612 = vmax.f32 %v611, 1e-06
    %v613 = vmul.f32 %v513, %v513
    %v614 = vmul.f32 %v516, %v516
    %v615 = vmul.f32 %v519, %v519
    %v616 = vmul.f32 %v522, %v522
    %v617 = vadd.f32 %v613, %v614
    %v618 = vadd.f32 %v617, %v615
    %v619 = vadd.f32 %v618, %v616
    %v620 = vrot.slane %v619, 4
    %v621 = vadd.f32 %v619, %v620
    %v622 = vrot.slane %v621, 2
    %v623 = vadd.f32 %v621, %v622
    %v624 = vrot.slane %v623, 1
    %v625 = vadd.f32 %v623, %v624
    %v626 = vmax.f32 %v625, 1e-24
    %v627 = vrsqrt.pop %v626
    %v628 = vmul.f32 %v627, %v626
    %v629 = vmul.f32 %v628, %v627
    %v630 = vmul.f32 0.5, %v629
    %v631 = vsub.f32 1.5, %v630
    %v632 = vmul.f32 %v627, %v631
    %vm633 = vweird.f32 %v626
    %vm634 = vweird.f32 %v627
    %vm635 = vmor %vm633, %vm634
    %v636 = vsel %vm635, %v627, %v632
    %v637 = vmul.f32 %v513, %v636
    %v638 = vmul.f32 %v516, %v636
    %v639 = vmul.f32 %v519, %v636
    %v640 = vmul.f32 %v522, %v636
    %641 = vmatpush.msra.mxu0 0.0
    %642 = vmatpush.msra.mxu0 0.0
    %643 = vmatpush.msra.mxu0 0.0
    %644 = vmatpush.msra.mxu0 0.0
    %645 = vmatpush.msra.mxu0 0.0
    %646 = vmatpush.msra.mxu0 0.0
    %647 = vmatpush.msra.mxu0 0.0
    %648 = vmatpush.msra.mxu0 0.0
    %649 = vmatpush.msra.mxu0 0.0
    %650 = vmatpush.msra.mxu0 0.0
    %651 = vmatpush.msra.mxu0 0.0
    %652 = vmatpush.msra.mxu0 0.0
    %653 = vmatpush.msra.mxu0 %v640
    %654 = vmatpush.msra.mxu0 %v639
    %655 = vmatpush.msra.mxu0 %v638
    %656 = vmatpush.msra.mxu0 %v637
    %657 = vmatmul.f32.gmra.mxu0 %v74
    %v658 = vpop.f32.mrf.mxu0
    %v659 = vadd.f32 0.0, %v658
    %660 = vmatmul.f32.gmra.mxu0 %v77
    %v661 = vpop.f32.mrf.mxu0
    %v662 = vadd.f32 0.0, %v661
    %663 = vdwg.mxu0
    %v664 = vrcp.pop %v612
    %v665 = vmul.f32 %v659, %v664
    %v666 = vmul.f32 %v662, %v664
    %v667 = vstv %s469
    %vm668 = vcmp.lt.s32.totalorder %v59, %v667
    %v669 = vsel %vm668, 1, 0
    %vm670 = vcmp.eq.s32.totalorder %v669, 1
    %v671 = vsel %vm670, %v665, -1e+30
    %v672 = vsel %vm670, %v666, -1e+30
    %673 = vmax.xlane.f32.xlu0 %v671
    %v674 = vpop.xlane.xlu0 %673
    %675 = vmax.xlane.f32.xlu0 %v672
    %v676 = vpop.xlane.xlu0 %675
    %v677 = vsub.f32 %v671, %v674
    %v678 = vsub.f32 %v672, %v676
    %v679 = vmul.f32 %v677, 1.442695
    %v680 = vpow.pop %v679
    %v681 = vmul.f32 %v678, 1.442695
    %v682 = vpow.pop %v681
    %683 = vadd.xlane.f32.xlu0 %v680
    %v684 = vpop.xlane.xlu0 %683
    %685 = vadd.xlane.f32.xlu0 %v682
    %v686 = vpop.xlane.xlu0 %685
    %v687 = vlog2.pop %v684
    %v688 = vmul.f32 %v687, 0.6931472
    %v689 = vlog2.pop %v686
    %v690 = vmul.f32 %v689, 0.6931472
    %v691 = vsub.f32 %v677, %v688
    %v692 = vsub.f32 %v678, %v690
    %v693 = vmul.f32 %v691, %v467
    %v694 = vmul.f32 %v692, %v468
    %695 = vadd.xlane.f32.xlu0 %v693
    %v696 = vpop.xlane.xlu0 %695
    %697 = vadd.xlane.f32.xlu0 %v694
    %v698 = vpop.xlane.xlu0 %697
    %v699 = vmul.f32 %v696, 0.5
    %v700 = vmul.f32 %v698, 0.5
    %v701 = vsub.f32 %v455, %v699
    %v702 = vsub.f32 %v456, %v700
    %v703 = vlaneseq
    %v704 = vshrl.u32 %v703, 7
    %v705 = vadd.s32 %v704, 8
    %vm706 = vcmp.eq.s32.totalorder %v704, %v59
    %vm707 = vcmp.eq.s32.totalorder %v705, %v59
    %v708 = vsel %vm706, %v701, 0.0
    %v709 = vsel %vm707, %v702, 0.0
    %v710 = vsel %vm127, %v708, 0.0
    %v711 = vsel %vm127, %v709, 0.0
    %v712 = vadd.f32 %v710, %v711
    %v713 = vrot.slane %v712, 4
    %v714 = vadd.f32 %v712, %v713
    %v715 = vrot.slane %v714, 2
    %v716 = vadd.f32 %v714, %v715
    %v717 = vrot.slane %v716, 1
    %v718 = vadd.f32 %v716, %v717
    %vm719 = vcmask 122880
    %720 = vst.msk [vmem:[#allocation4] sm:$0x1] %vm719, %v718
    // Predicated region
    $region10: #{pcl_loss.1} parent=1 // pred_check
      _
    $region11: #{pcl_loss.1} parent=1 // pred_check_branch
      %722 = sbr.rel (0) target = $region13
    $region12: #{pcl_loss.1} parent=1 // pred_region
      %724 = vsyncadd [#allocation5], 0
      %s726 = sshll.u32 [#allocation4], 4
      %s727 = int_to_ptr.vmem [resolvable:$true] %s726
      %s728 = sshll.u32 %s3, 4
      %s729 = int_to_ptr.hbm [resolvable:$true] %s728
      %731 = dma.vmem_to_hbm [thread:$0]  %s727, 16, %s729, [#allocation5]
    $region13: #{pcl_loss.1} parent=1 // pred_fallthru
      _
    // Predicated region
    $region14: #{pcl_loss.1} parent=1 // pred_check
      _
    $region15: #{pcl_loss.1} parent=1 // pred_check_branch
      %733 = sbr.rel (0) target = $region17
    $region16: #{pcl_loss.1} parent=1 // pred_region
      %735 = dma.done [#allocation5], 16
    $region17: #{pcl_loss.1} parent=1 // pred_fallthru
      _
    %736 = vsyncpa [#allocation5], 1

</llo_original>
